<compile_context>
chip_gen: v7x
topology: tpu7x:2x2x1
jax: 0.10.0
libtpu: 0.0.40
codegen_flags: <defaults>
</compile_context>

<pallas_src>
import functools

import jax
import jax.numpy as jnp
from jax import lax
from jax.experimental import pallas as pl
from jax.experimental.pallas import tpu as pltpu


def _round_up(x, m):
    return (x + m - 1) // m * m


# ----------------------------- Pallas kernel ------------------------------- #
def _patch_embed_kernel(p_ref, w_ref, b_ref, g_ref, beta_ref, o_ref):
    # p_ref:  (tm, Kd) bf16 im2col patch tile
    # w_ref:  (Kd, E)  bf16 conv weight as a matmul operand (resident across grid)
    # b_ref / g_ref / beta_ref: (1, E) f32 conv bias, LN gamma, LN beta
    # o_ref:  (tm, E)  f32 output tile (final token layout, nothing sliced later)
    x = jnp.dot(p_ref[...], w_ref[...], preferred_element_type=jnp.float32)
    x = x + b_ref[...]

    # Fused LayerNorm over the true embed dim (block's last dim is exactly E,
    # so no masked statistics are needed).
    mu = jnp.mean(x, axis=-1, keepdims=True)
    xc = x - mu
    var = jnp.mean(xc * xc, axis=-1, keepdims=True)
    xn = xc * lax.rsqrt(var + 1e-5)  # nn.LayerNorm default eps
    o_ref[...] = (xn * g_ref[...] + beta_ref[...]).astype(o_ref.dtype)


def _pallas_patch_embed(patches, w_mat, bias, gamma, beta, *, tm):
    Mp, Kd = patches.shape
    E = w_mat.shape[1]
    assert Mp % tm == 0 and tm % 8 == 0

    return pl.pallas_call(
        _patch_embed_kernel,
        out_shape=jax.ShapeDtypeStruct((Mp, E), jnp.float32),
        grid_spec=pltpu.PrefetchScalarGridSpec(
            num_scalar_prefetch=0,
            grid=(Mp // tm,),
            in_specs=[
                pl.BlockSpec((tm, Kd), lambda i: (i, 0)),   # patches tile
                pl.BlockSpec((Kd, E), lambda i: (0, 0)),    # weight (resident)
                pl.BlockSpec((1, E), lambda i: (0, 0)),     # conv bias
                pl.BlockSpec((1, E), lambda i: (0, 0)),     # LN gamma
                pl.BlockSpec((1, E), lambda i: (0, 0)),     # LN beta
            ],
            out_specs=pl.BlockSpec((tm, E), lambda i: (i, 0)),
        ),
        compiler_params=pltpu.CompilerParams(
            dimension_semantics=("parallel",),
        ),
    )(patches, w_mat, bias, gamma, beta)


# ------------------------------ JAX glue ----------------------------------- #
def _im2col(x, K, stride, pad):
    # x: (B, C, H, W) NCHW, matching the PyTorch conv input convention.
    B, C, H, W = x.shape
    Hout = (H + 2 * pad - K) // stride + 1
    Wout = (W + 2 * pad - K) // stride + 1
    xp = jnp.pad(x, ((0, 0), (0, 0), (pad, pad), (pad, pad)))
    cols = []
    for ki in range(K):
        for kj in range(K):
            cols.append(
                xp[:, :,
                   ki:ki + stride * (Hout - 1) + 1:stride,
                   kj:kj + stride * (Wout - 1) + 1:stride]
            )
    # (K*K, B, C, Hout, Wout) -> (B, Hout, Wout, C, K, K); column order (c, ki, kj)
    # matches conv_w.reshape(E, C*K*K).
    p = jnp.stack(cols, axis=0).reshape(K, K, B, C, Hout, Wout)
    p = p.transpose(2, 4, 5, 3, 0, 1)
    return p.reshape(B * Hout * Wout, C * K * K), Hout, Wout


def _choose_tiling(M):
    """Pick a row tile tm (8-aligned) and padded row count Mp.

    Prefer an 8-aligned divisor of M so no row padding (and no post-kernel row
    slice / copy) is needed.  Keep tiles large to amortize the ~0.35us grid-step
    overhead and keep the MXU M-dim fat, while still giving big problems >= 2
    grid steps so the "parallel" axis can shard across TensorCores.
    """
    if M <= 1024:
        tm = _round_up(max(M, 8), 8)
        return tm, tm
    best = 0
    for cand in range(256, 1025, 8):
        if M % cand == 0:
            best = cand
    if best:
        return best, M
    for cand in (1024, 512, 256):
        if M >= 2 * cand:
            return cand, _round_up(M, cand)
    return 256, _round_up(M, 256)


def overlap_patch_embed(x, conv_w, conv_b, ln_gamma, ln_beta, *,
                        patch_size, stride):
    """Equivalent of OverlapPatchEmbed.forward.

    Returns (tokens (B, N, E), H // stride, W // stride) exactly like the
    PyTorch module.
    """
    B, C, H, W = x.shape
    E = conv_w.shape[0]
    pad = patch_size // 2

    # im2col in bf16: halves the HBM traffic of the unfolded patch matrix,
    # which dominates this memory-bound op; accumulation stays f32 in-kernel.
    # TODO(synk): fully fusing the unfold into the kernel (memory_space=pl.ANY
    # + manual strided DMAs) would remove the im2col materialization entirely.
    patches, Hout, Wout = _im2col(x.astype(jnp.bfloat16), patch_size, stride, pad)
    M, Kd = patches.shape

    tm, Mp = _choose_tiling(M)
    if Mp != M:
        patches = jnp.pad(patches, ((0, Mp - M), (0, 0)))

    # conv weight (E, C, K, K) -> (Kd, E) so conv == im2col @ W.
    w_mat = conv_w.reshape(E, -1).T.astype(jnp.bfloat16)
    bias = conv_b.astype(jnp.float32).reshape(1, E)
    gamma = ln_gamma.astype(jnp.float32).reshape(1, E)
    beta = ln_beta.astype(jnp.float32).reshape(1, E)

    out = _pallas_patch_embed(patches, w_mat, bias, gamma, beta, tm=tm)
    tokens = out[:M].reshape(B, Hout * Wout, E)   # no-op slice when Mp == M
    return tokens, H // stride, W // stride


# ------------------------------ reference ---------------------------------- #
def _reference(x, conv_w, conv_b, ln_gamma, ln_beta, *, patch_size, stride):
    # Matches the kernel's precision choices: bf16 conv inputs, f32 accumulation.
    pad = patch_size // 2
    y = lax.conv_general_dilated(
        x.astype(jnp.bfloat16), conv_w.astype(jnp.bfloat16),
        window_strides=(stride, stride),
        padding=[(pad, pad), (pad, pad)],
        dimension_numbers=("NCHW", "OIHW", "NCHW"),
        preferred_element_type=jnp.float32,
    ) + conv_b.reshape(1, -1, 1, 1)
    B, E, Ho, Wo = y.shape
    t = y.reshape(B, E, Ho * Wo).transpose(0, 2, 1)  # (B, N, E)
    mu = jnp.mean(t, axis=-1, keepdims=True)
    var = jnp.mean(jnp.square(t - mu), axis=-1, keepdims=True)
    tn = (t - mu) * lax.rsqrt(var + 1e-5)
    return tn * ln_gamma + ln_beta, x.shape[2] // stride, x.shape[3] // stride


# --------------------------------- main ------------------------------------ #
if __name__ == "__main__":
    # Small shapes consistent with the module's forward:
    # B=2, in_chans=4, H=W=16, patch_size=7, stride=4, embed_dim=32.
    B, C, H, W = 2, 4, 16, 16
    patch_size, stride, embed_dim = 7, 4, 32

    key = jax.random.PRNGKey(0)
    kx, kw, kb = jax.random.split(key, 3)
    x = jax.random.normal(kx, (B, C, H, W), dtype=jnp.float32)
    conv_w = 0.1 * jax.random.normal(
        kw, (embed_dim, C, patch_size, patch_size), dtype=jnp.float32)
    conv_b = 0.1 * jax.random.normal(kb, (embed_dim,), dtype=jnp.float32)
    ln_gamma = jnp.ones((embed_dim,), dtype=jnp.float32)
    ln_beta = jnp.zeros((embed_dim,), dtype=jnp.float32)

    fwd = jax.jit(functools.partial(
        overlap_patch_embed, patch_size=patch_size, stride=stride))
    tokens, h_out, w_out = fwd(x, conv_w, conv_b, ln_gamma, ln_beta)
    tokens = jax.block_until_ready(tokens)

    ref_tokens, ref_h, ref_w = _reference(
        x, conv_w, conv_b, ln_gamma, ln_beta,
        patch_size=patch_size, stride=stride)

    assert tokens.shape == (B, (H // stride) * (W // stride), embed_dim)
    assert (h_out, w_out) == (ref_h, ref_w) == (H // stride, W // stride)
    assert jnp.allclose(tokens, ref_tokens, atol=1e-2, rtol=1e-2), (
        float(jnp.max(jnp.abs(tokens - ref_tokens))))

    print("KERNEL_OK")
</pallas_src>

<mosaic_0001>
module attributes {stable_mosaic.version = 11 : i64} {
  func.func @_patch_embed_kernel(%arg0: i32, %arg1: memref<32x196xbf16, #tpu.memory_space<vmem>>, %arg2: memref<196x32xbf16, #tpu.memory_space<vmem>>, %arg3: memref<1x32xf32, #tpu.memory_space<vmem>>, %arg4: memref<1x32xf32, #tpu.memory_space<vmem>>, %arg5: memref<1x32xf32, #tpu.memory_space<vmem>>, %arg6: memref<32x32xf32, #tpu.memory_space<vmem>>) attributes {dimension_semantics = [#tpu.dimension_semantics<parallel>], iteration_bounds = array<i64: 1>, scalar_prefetch = 0 : i64, scratch_operands = 0 : i64, tpu.core_type = #tpu.core_type<tc>, window_params = [{transform_indices = @transform_0, window_bounds = array<i64: 32, 196>}, {pipeline_mode = #tpu.pipeline_mode<synchronous>, transform_indices = @transform_1, window_bounds = array<i64: 196, 32>}, {pipeline_mode = #tpu.pipeline_mode<synchronous>, transform_indices = @transform_2, window_bounds = array<i64: 1, 32>}, {pipeline_mode = #tpu.pipeline_mode<synchronous>, transform_indices = @transform_3, window_bounds = array<i64: 1, 32>}, {pipeline_mode = #tpu.pipeline_mode<synchronous>, transform_indices = @transform_4, window_bounds = array<i64: 1, 32>}, {transform_indices = @transform_5, window_bounds = array<i64: 32, 32>}]} {
    %c0 = arith.constant 0 : index
    %c0_0 = arith.constant 0 : index
    %0 = vector.load %arg1[%c0, %c0_0] : memref<32x196xbf16, #tpu.memory_space<vmem>>, vector<32x196xbf16>
    %c0_1 = arith.constant 0 : index
    %c0_2 = arith.constant 0 : index
    %1 = vector.load %arg2[%c0_1, %c0_2] : memref<196x32xbf16, #tpu.memory_space<vmem>>, vector<196x32xbf16>
    %cst = arith.constant dense<0.000000e+00> : vector<32x32xf32>
    %2 = tpu.matmul %0, %1, %cst {dimension_numbers = #tpu.dot_dimension_numbers<[1], [0], [0], [1], [0, 0, 1, 1], [], []>} : vector<32x196xbf16>, vector<196x32xbf16>, vector<32x32xf32> -> vector<32x32xf32>
    %c0_3 = arith.constant 0 : index
    %c0_4 = arith.constant 0 : index
    %3 = vector.load %arg3[%c0_3, %c0_4] : memref<1x32xf32, #tpu.memory_space<vmem>>, vector<1x32xf32>
    %4 = vector.broadcast %3 : vector<1x32xf32> to vector<32x32xf32>
    %5 = arith.addf %2, %4 : vector<32x32xf32>
    %cst_5 = arith.constant dense<0.000000e+00> : vector<32xf32>
    %6 = vector.multi_reduction <add>, %5, %cst_5 [1] : vector<32x32xf32> to vector<32xf32>
    %7 = vector.shape_cast %6 : vector<32xf32> to vector<32x1xf32>
    %cst_6 = arith.constant 3.200000e+01 : f32
    %8 = vector.broadcast %cst_6 : f32 to vector<32x1xf32>
    %9 = arith.divf %7, %8 : vector<32x1xf32>
    %10 = vector.broadcast %9 : vector<32x1xf32> to vector<32x32xf32>
    %11 = arith.subf %5, %10 : vector<32x32xf32>
    %12 = arith.mulf %11, %11 : vector<32x32xf32>
    %cst_7 = arith.constant dense<0.000000e+00> : vector<32xf32>
    %13 = vector.multi_reduction <add>, %12, %cst_7 [1] : vector<32x32xf32> to vector<32xf32>
    %14 = vector.shape_cast %13 : vector<32xf32> to vector<32x1xf32>
    %cst_8 = arith.constant 3.200000e+01 : f32
    %15 = vector.broadcast %cst_8 : f32 to vector<32x1xf32>
    %16 = arith.divf %14, %15 : vector<32x1xf32>
    %cst_9 = arith.constant 9.99999974E-6 : f32
    %17 = vector.broadcast %cst_9 : f32 to vector<32x1xf32>
    %18 = arith.addf %16, %17 : vector<32x1xf32>
    %19 = math.rsqrt %18 : vector<32x1xf32>
    %20 = vector.broadcast %19 : vector<32x1xf32> to vector<32x32xf32>
    %21 = arith.mulf %11, %20 : vector<32x32xf32>
    %c0_10 = arith.constant 0 : index
    %c0_11 = arith.constant 0 : index
    %22 = vector.load %arg4[%c0_10, %c0_11] : memref<1x32xf32, #tpu.memory_space<vmem>>, vector<1x32xf32>
    %23 = vector.broadcast %22 : vector<1x32xf32> to vector<32x32xf32>
    %24 = arith.mulf %21, %23 : vector<32x32xf32>
    %c0_12 = arith.constant 0 : index
    %c0_13 = arith.constant 0 : index
    %25 = vector.load %arg5[%c0_12, %c0_13] : memref<1x32xf32, #tpu.memory_space<vmem>>, vector<1x32xf32>
    %26 = vector.broadcast %25 : vector<1x32xf32> to vector<32x32xf32>
    %27 = arith.addf %24, %26 : vector<32x32xf32>
    %c0_14 = arith.constant 0 : index
    %c0_15 = arith.constant 0 : index
    %28 = vector.load %arg6[%c0_14, %c0_15] : memref<32x32xf32, #tpu.memory_space<vmem>>, vector<32x32xf32>
    tpu.vector_store %arg6[%c0_14, %c0_15], %27 {strides = array<i32>} : memref<32x32xf32, #tpu.memory_space<vmem>>, vector<32x32xf32>,
    return
  }
  func.func @transform_0(%arg0: i32) -> (i32, i32) {
    %c0_i32 = arith.constant 0 : i32
    %c0_i32_0 = arith.constant 0 : i32
    return %arg0, %c0_i32 : i32, i32
  }
  func.func @transform_1(%arg0: i32) -> (i32, i32) {
    %c0_i32 = arith.constant 0 : i32
    %c0_i32_0 = arith.constant 0 : i32
    %c0_i32_1 = arith.constant 0 : i32
    return %c0_i32, %c0_i32_0 : i32, i32
  }
  func.func @transform_2(%arg0: i32) -> (i32, i32) {
    %c0_i32 = arith.constant 0 : i32
    %c0_i32_0 = arith.constant 0 : i32
    %c0_i32_1 = arith.constant 0 : i32
    return %c0_i32, %c0_i32_0 : i32, i32
  }
  func.func @transform_3(%arg0: i32) -> (i32, i32) {
    %c0_i32 = arith.constant 0 : i32
    %c0_i32_0 = arith.constant 0 : i32
    %c0_i32_1 = arith.constant 0 : i32
    return %c0_i32, %c0_i32_0 : i32, i32
  }
  func.func @transform_4(%arg0: i32) -> (i32, i32) {
    %c0_i32 = arith.constant 0 : i32
    %c0_i32_0 = arith.constant 0 : i32
    %c0_i32_1 = arith.constant 0 : i32
    return %c0_i32, %c0_i32_0 : i32, i32
  }
  func.func @transform_5(%arg0: i32) -> (i32, i32) {
    %c0_i32 = arith.constant 0 : i32
    %c0_i32_0 = arith.constant 0 : i32
    return %arg0, %c0_i32 : i32, i32
  }
}

</mosaic_0001>

<llo_original>
// kernel: overlap_patch_embed.1
$region0: #{overlap_patch_embed.1}
  #allocation0 [shape = 'u32[]', space=smem, size = 0x4, offset = 0x4, fixed_abs, tag = 'smem constant byte address 0x4 - core index']
  #allocation1 [shape = 'u32[144,128]{1,0:T(1,128)}', space=vmem, size = 0x12000, scoped, tag = 'internal scratch']
  %s0 = inlined_call_operand.vmem [shape: bf16[32,196], index: 0, kind: input, shape index: {}]
  %s1 = inlined_call_operand.vmem [shape: bf16[196,32], index: 1, kind: input, shape index: {}]
  %s2 = inlined_call_operand.vmem [shape: f32[1,32], index: 2, kind: input, shape index: {}]
  %s3 = inlined_call_operand.vmem [shape: f32[1,32], index: 3, kind: input, shape index: {}]
  %s4 = inlined_call_operand.vmem [shape: f32[1,32], index: 4, kind: input, shape index: {}]
  %s5 = inlined_call_operand.hbm [shape: f32[32,32], index: 5, kind: output, shape index: {}]
  %s6 = sld [smem:[#allocation0]]
  $region30: #{overlap_patch_embed.1} parent=0
    _
  %s8 = ssub.s32 1, %s6
  %s9 = scalar_select 0, %s8, %s6
  $region1: #{overlap_patch_embed.1} parent=0
    #allocation2 [shape = 'u8[16384]{0}', space=vmem, size = 0x4000, scoped, tag = 'output window, operand 0, single buffered']
    #allocation3 [shape = 's32[1]{0}', space=sflag, size = 0x4, scoped, tag = 'scoped memory for overlap_patch_embed.1']
    %10 = vsyncpa [#allocation3], 0
    // Predicated region
    $region2: #{overlap_patch_embed.1} parent=1 // pred_check
      _
    $region3: #{overlap_patch_embed.1} parent=1 // pred_check_branch
      %12 = sbr.rel (0) target = $region5
    $region4: #{overlap_patch_embed.1} parent=1 // pred_region
      _
    $region5: #{overlap_patch_embed.1} parent=1 // pred_fallthru
      _
    // Predicated region
    $region6: #{overlap_patch_embed.1} parent=1 // pred_check
      _
    $region7: #{overlap_patch_embed.1} parent=1 // pred_check_branch
      %14 = sbr.rel (0) target = $region9
    $region8: #{overlap_patch_embed.1} parent=1 // pred_region
      _
    $region9: #{overlap_patch_embed.1} parent=1 // pred_fallthru
      _
    // Predicated region
    $region10: #{overlap_patch_embed.1} parent=1 // pred_check
      _
    $region11: #{overlap_patch_embed.1} parent=1 // pred_check_branch
      %16 = sbr.rel (0) target = $region13
    $region12: #{overlap_patch_embed.1} parent=1 // pred_region
      _
    $region13: #{overlap_patch_embed.1} parent=1 // pred_fallthru
      _
    // Predicated region
    $region14: #{overlap_patch_embed.1} parent=1 // pred_check
      _
    $region15: #{overlap_patch_embed.1} parent=1 // pred_check_branch
      %18 = sbr.rel (0) target = $region17
    $region16: #{overlap_patch_embed.1} parent=1 // pred_region
      _
    $region17: #{overlap_patch_embed.1} parent=1 // pred_fallthru
      _
    // Predicated region
    $region18: #{overlap_patch_embed.1} parent=1 // pred_check
      _
    $region19: #{overlap_patch_embed.1} parent=1 // pred_check_branch
      %20 = sbr.rel (0) target = $region21
    $region20: #{overlap_patch_embed.1} parent=1 // pred_region
      _
    $region21: #{overlap_patch_embed.1} parent=1 // pred_fallthru
      _
    %v22 = vld [vmem:[%s0] sm:$0xff]
    %v23 = vld [vmem:[%s0 + $0x8] sm:$0xff]
    %v24 = vld [vmem:[%s0 + $0x10] sm:$0xff]
    %v25 = vld [vmem:[%s0 + $0x18] sm:$0xff]
    %v26 = vld [vmem:[%s1] sm:$0xf]
    %v27 = vld [vmem:[%s1 + $0x4] sm:$0xf]
    %v28 = vld [vmem:[%s1 + $0x8] sm:$0xf]
    %v29 = vld [vmem:[%s1 + $0xc] sm:$0xf]
    %v30 = vld [vmem:[%s1 + $0x10] sm:$0xf]
    %v31 = vld [vmem:[%s1 + $0x14] sm:$0xf]
    %v32 = vld [vmem:[%s1 + $0x18] sm:$0xf]
    %v33 = vld [vmem:[%s1 + $0x1c] sm:$0xf]
    %v34 = vld [vmem:[%s1 + $0x20] sm:$0xf]
    %v35 = vld [vmem:[%s1 + $0x24] sm:$0xf]
    %v36 = vld [vmem:[%s1 + $0x28] sm:$0xf]
    %v37 = vld [vmem:[%s1 + $0x2c] sm:$0xf]
    %v38 = vld [vmem:[%s1 + $0x30] sm:$0xf]
    %v39 = vld [vmem:[%s1 + $0x34] sm:$0xf]
    %v40 = vld [vmem:[%s1 + $0x38] sm:$0xf]
    %v41 = vld [vmem:[%s1 + $0x3c] sm:$0xf]
    %v42 = vld [vmem:[%s1 + $0x40] sm:$0xf]
    %v43 = vld [vmem:[%s1 + $0x44] sm:$0xf]
    %v44 = vld [vmem:[%s1 + $0x48] sm:$0xf]
    %v45 = vld [vmem:[%s1 + $0x4c] sm:$0xf]
    %v46 = vld [vmem:[%s1 + $0x50] sm:$0xf]
    %v47 = vld [vmem:[%s1 + $0x54] sm:$0xf]
    %v48 = vld [vmem:[%s1 + $0x58] sm:$0xf]
    %v49 = vld [vmem:[%s1 + $0x5c] sm:$0xf]
    %v50 = vld [vmem:[%s1 + $0x60] sm:$0x3]
    %v51 = vld [vmem:[%s2] sm:$0x1]
    %v53 = vlaneseq
    %v54 = vshrl.u32 %v53, 7
    %v55 = vsub.s32 0, %v54
    %v56 = vrot.slane %v51, %v55
    %v62 = vunpack.c.l.b16 %v22
    %v63 = vunpack.c.h.b16 %v22
    %v64 = vunpack.c.l.b16 %v23
    %v65 = vunpack.c.h.b16 %v23
    %v66 = vunpack.c.l.b16 %v24
    %v67 = vunpack.c.h.b16 %v24
    %v68 = vunpack.c.l.b16 %v25
    %v69 = vunpack.c.h.b16 %v25
    %v70 = vpack.c.b16 %v64, %v62
    %v71 = vpack.c.b16 %v65, %v63
    %v72 = vpack.c.b16 %v68, %v66
    %v73 = vpack.c.b16 %v69, %v67
    %v101 = vunpack.c.l.b16 %v26
    %v102 = vunpack.c.l.b16 %v27
    %v103 = vunpack.c.l.b16 %v28
    %v104 = vunpack.c.l.b16 %v29
    %v105 = vunpack.c.l.b16 %v30
    %v106 = vunpack.c.l.b16 %v31
    %v107 = vunpack.c.l.b16 %v32
    %v108 = vunpack.c.l.b16 %v33
    %v109 = vunpack.c.l.b16 %v34
    %v110 = vunpack.c.l.b16 %v35
    %v111 = vunpack.c.l.b16 %v36
    %v112 = vunpack.c.l.b16 %v37
    %v113 = vunpack.c.l.b16 %v38
    %v114 = vunpack.c.l.b16 %v39
    %v115 = vunpack.c.l.b16 %v40
    %v116 = vunpack.c.l.b16 %v41
    %v117 = vunpack.c.l.b16 %v42
    %v118 = vunpack.c.l.b16 %v43
    %v119 = vunpack.c.l.b16 %v44
    %v120 = vunpack.c.l.b16 %v45
    %v121 = vunpack.c.l.b16 %v46
    %v122 = vunpack.c.l.b16 %v47
    %v123 = vunpack.c.l.b16 %v48
    %v124 = vunpack.c.l.b16 %v49
    %v125 = vunpack.c.l.b16 %v50
    %v126 = vpack.c.b16 %v102, %v101
    %v127 = vpack.c.b16 %v104, %v103
    %v128 = vpack.c.b16 %v106, %v105
    %v129 = vpack.c.b16 %v108, %v107
    %v130 = vpack.c.b16 %v110, %v109
    %v131 = vpack.c.b16 %v112, %v111
    %v132 = vpack.c.b16 %v114, %v113
    %v133 = vpack.c.b16 %v116, %v115
    %v134 = vpack.c.b16 %v118, %v117
    %v135 = vpack.c.b16 %v120, %v119
    %v136 = vpack.c.b16 %v122, %v121
    %v137 = vpack.c.b16 %v124, %v123
    %v138 = vpack.c.b16 %v125, %v125
    %vm151 = vcmask 556032
    %v153 = vsel %vm151, %v71, 0
    %v156 = vsel %vm151, %v73, 0
    %vm158 = vcmask 1041408
    %v160 = vsel %vm158, %v138, 0
    %162 = vmatprep.subr.bf16.mxu0 0
    %163 = vmatpush1.bf16.msra.mxu0 %v126
    %164 = vmatprep.subr.bf16.mxu0 0
    %165 = vmatpush1.bf16.msra.mxu0 %v127
    %166 = vmatprep.subr.bf16.mxu0 0
    %167 = vmatpush1.bf16.msra.mxu0 %v128
    %168 = vmatprep.subr.bf16.mxu0 0
    %169 = vmatpush1.bf16.msra.mxu0 %v129
    %170 = vmatprep.subr.bf16.mxu0 0
    %171 = vmatpush1.bf16.msra.mxu0 %v130
    %172 = vmatprep.subr.bf16.mxu0 0
    %173 = vmatpush1.bf16.msra.mxu0 %v131
    %174 = vmatprep.subr.bf16.mxu0 0
    %175 = vmatpush1.bf16.msra.mxu0 %v132
    %176 = vmatprep.subr.bf16.mxu0 0
    %177 = vmatpush1.bf16.msra.mxu0 %v133
    %178 = vmatprep.subr.bf16.mxu0 0
    %179 = vmatpush1.bf16.msra.mxu0 %v134
    %180 = vmatprep.subr.bf16.mxu0 0
    %181 = vmatpush1.bf16.msra.mxu0 %v135
    %182 = vmatprep.subr.bf16.mxu0 0
    %183 = vmatpush1.bf16.msra.mxu0 %v136
    %184 = vmatprep.subr.bf16.mxu0 0
    %185 = vmatpush1.bf16.msra.mxu0 %v137
    %186 = vmatprep.subr.bf16.mxu0 0
    %187 = vmatpush1.bf16.msra.mxu0 %v160
    %188 = vmatprep.subr.bf16.mxu0 0
    %189 = vmatpush1.bf16.msra.mxu0 0
    %190 = vmatprep.subr.bf16.mxu0 0
    %191 = vmatpush1.bf16.msra.mxu0 0
    %192 = vmatprep.subr.bf16.mxu0 0
    %193 = vmatpush1.bf16.msra.mxu0 0
    %194 = vmatprep.mubr.bf16.mxu0 %v153
    %195 = vmatmul.mubr.bf16.gmra.mrb[0].mxu0 %v70
    %v196 = vpop.f32.mrb[0].mxu0
    %v197 = vadd.f32 %v56, %v196
    %v198 = vpop.f32.mrb[0].mxu0
    %v199 = vpop.f32.mrb[0].mxu0
    %v200 = vadd.f32 %v56, %v199
    %v201 = vpop.f32.mrb[0].mxu0
    %202 = vmatprep.mubr.bf16.mxu0 %v156
    %203 = vmatmul.mubr.bf16.gmra.mrb[0].mxu0 %v72
    %v204 = vpop.f32.mrb[0].mxu0
    %v205 = vadd.f32 %v56, %v204
    %v206 = vpop.f32.mrb[0].mxu0
    %v207 = vpop.f32.mrb[0].mxu0
    %v208 = vadd.f32 %v56, %v207
    %v209 = vpop.f32.mrb[0].mxu0
    %210 = vdwg.mxu0
    %vm211 = vcmask 261120
    %v212 = vsel %vm211, %v197, 0.0
    %213 = vadd.xlane.f32.xlu0 %v212
    %v214 = vpop.xlane.xlu0 %213
    %v215 = vsel %vm211, %v200, 0.0
    %216 = vadd.xlane.f32.xlu0 %v215
    %v217 = vpop.xlane.xlu0 %216
    %v218 = vsel %vm211, %v205, 0.0
    %219 = vadd.xlane.f32.xlu0 %v218
    %v220 = vpop.xlane.xlu0 %219
    %v221 = vsel %vm211, %v208, 0.0
    %222 = vadd.xlane.f32.xlu0 %v221
    %v223 = vpop.xlane.xlu0 %222
    %v224 = vrcp.pop 32.0
    %v225 = vmul.f32 %v214, %v224
    %v226 = vmul.f32 %v217, %v224
    %v227 = vmul.f32 %v220, %v224
    %v228 = vmul.f32 %v223, %v224
    %v229 = vsub.f32 %v197, %v225
    %v230 = vsub.f32 %v200, %v226
    %v231 = vsub.f32 %v205, %v227
    %v232 = vsub.f32 %v208, %v228
    %v233 = vmul.f32 %v229, %v229
    %v234 = vmul.f32 %v230, %v230
    %v235 = vmul.f32 %v231, %v231
    %v236 = vmul.f32 %v232, %v232
    %v237 = vsel %vm211, %v233, 0.0
    %238 = vadd.xlane.f32.xlu0 %v237
    %v239 = vpop.xlane.xlu0 %238
    %v240 = vsel %vm211, %v234, 0.0
    %241 = vadd.xlane.f32.xlu0 %v240
    %v242 = vpop.xlane.xlu0 %241
    %v243 = vsel %vm211, %v235, 0.0
    %244 = vadd.xlane.f32.xlu0 %v243
    %v245 = vpop.xlane.xlu0 %244
    %v246 = vsel %vm211, %v236, 0.0
    %247 = vadd.xlane.f32.xlu0 %v246
    %v248 = vpop.xlane.xlu0 %247
    %v249 = vmul.f32 %v239, %v224
    %v250 = vmul.f32 %v242, %v224
    %v251 = vmul.f32 %v245, %v224
    %v252 = vmul.f32 %v248, %v224
    %v253 = vadd.f32 %v249, 1e-05
    %v254 = vadd.f32 %v250, 1e-05
    %v255 = vadd.f32 %v251, 1e-05
    %v256 = vadd.f32 %v252, 1e-05
    %v257 = vrsqrt.pop %v253
    %v258 = vrsqrt.pop %v254
    %v259 = vrsqrt.pop %v255
    %v260 = vrsqrt.pop %v256
    %v261 = vmul.f32 %v229, %v257
    %v262 = vmul.f32 %v230, %v258
    %v263 = vmul.f32 %v231, %v259
    %v264 = vmul.f32 %v232, %v260
    %v265 = vld [vmem:[%s3] sm:$0x1]
    %v267 = vlaneseq
    %v268 = vshrl.u32 %v267, 7
    %v269 = vsub.s32 0, %v268
    %v270 = vrot.slane %v265, %v269
    %v272 = vmul.f32 %v261, %v270
    %v273 = vmul.f32 %v262, %v270
    %v274 = vmul.f32 %v263, %v270
    %v275 = vmul.f32 %v264, %v270
    %v276 = vld [vmem:[%s4] sm:$0x1]
    %v278 = vlaneseq
    %v279 = vshrl.u32 %v278, 7
    %v280 = vsub.s32 0, %v279
    %v281 = vrot.slane %v276, %v280
    %v283 = vadd.f32 %v272, %v281
    %v284 = vadd.f32 %v273, %v281
    %v285 = vadd.f32 %v274, %v281
    %v286 = vadd.f32 %v275, %v281
    %287 = vst.msk [vmem:[#allocation2] sm:$0xff] %vm211, %v283
    %288 = vst.msk [vmem:[#allocation2 + $0x8] sm:$0xff] %vm211, %v284
    %289 = vst.msk [vmem:[#allocation2 + $0x10] sm:$0xff] %vm211, %v285
    %290 = vst.msk [vmem:[#allocation2 + $0x18] sm:$0xff] %vm211, %v286
    // Predicated region
    $region22: #{overlap_patch_embed.1} parent=1 // pred_check
      _
    $region23: #{overlap_patch_embed.1} parent=1 // pred_check_branch
      %292 = sbr.rel (0) target = $region25
    $region24: #{overlap_patch_embed.1} parent=1 // pred_region
      %s294 = ssub.s32 512, 512
      %295 = vsyncadd [#allocation3], %s294
      %s296 = sshll.u32 [#allocation2], 4
      %s297 = int_to_ptr.vmem [resolvable:$true] %s296
      %302 = dma.vmem_to_hbm [thread:$0]  %s297, 512, %s5, [#allocation3], 128, 128, 8
    $region25: #{overlap_patch_embed.1} parent=1 // pred_fallthru
      _
    // Predicated region
    $region26: #{overlap_patch_embed.1} parent=1 // pred_check
      _
    $region27: #{overlap_patch_embed.1} parent=1 // pred_check_branch
      %304 = sbr.rel (0) target = $region29
    $region28: #{overlap_patch_embed.1} parent=1 // pred_region
      %305 = dma.done [#allocation3], 512
    $region29: #{overlap_patch_embed.1} parent=1 // pred_fallthru
      _
    %306 = vsyncpa [#allocation3], 1

</llo_original>
